<compile_context>
chip_gen: v7x
topology: tpu7x:2x2x1
jax: 0.10.0
libtpu: 0.0.40
codegen_flags: <defaults>
</compile_context>

<pallas_src>
import functools
import math

import jax
import jax.numpy as jnp
from jax.experimental import pallas as pl
from jax.experimental.pallas import tpu as pltpu


# --------------------------------------------------------------------------------------
# helpers
# --------------------------------------------------------------------------------------
def _gelu_exact(x):
    # nn.GELU default (erf-based, not tanh approximation)
    return 0.5 * x * (1.0 + jax.lax.erf(x * (1.0 / math.sqrt(2.0))))


def _full_spec(shape):
    """Whole-array-resident VMEM block (weights / tiny stats)."""
    zeros = (0,) * len(shape)
    return pl.BlockSpec(shape, lambda *_: zeros)


def _pick_row_tile(m):
    """Largest multiple-of-8 divisor of m (<=512); fall back to full m."""
    cands = [t for t in range(8, min(m, 512) + 1, 8) if m % t == 0]
    return max(cands) if cands else m


def _pick_group_tile(g, seq_len):
    """Largest divisor of g whose f32 score block stays a few MiB."""
    best = 1
    for d in range(1, g + 1):
        if g % d == 0 and d * seq_len * seq_len * 4 <= (4 << 20):
            best = d
    return best


# --------------------------------------------------------------------------------------
# kernels
# --------------------------------------------------------------------------------------
def _qkv_proj_kernel(scale, x_ref, wq_ref, bq_ref, wk_ref, bk_ref, wv_ref, bv_ref,
                     q_ref, k_ref, v_ref):
    """Flattened-row Q/K/V projections. bf16 MXU operands, f32 accumulation."""
    x = x_ref[...].astype(jnp.bfloat16)

    def proj(w_ref, b_ref):
        return (jnp.dot(x, w_ref[...].astype(jnp.bfloat16),
                        preferred_element_type=jnp.float32)
                + b_ref[...].astype(jnp.float32))

    q_ref[...] = (proj(wq_ref, bq_ref) * scale).astype(q_ref.dtype)  # fold 1/sqrt(d_k) into q
    k_ref[...] = proj(wk_ref, bk_ref).astype(k_ref.dtype)
    v_ref[...] = proj(wv_ref, bv_ref).astype(v_ref.dtype)


def _attn_kernel(q_ref, k_ref, v_ref, o_ref):
    """Batched scaled-dot-product attention over a tile of (batch*head) groups."""
    q = q_ref[...].astype(jnp.bfloat16)        # (gt, L, dk)
    k = k_ref[...].astype(jnp.bfloat16)
    v = v_ref[...].astype(jnp.bfloat16)

    s = jnp.einsum('gld,gmd->glm', q, k, preferred_element_type=jnp.float32)
    s = s - jnp.max(s, axis=-1, keepdims=True)
    p = jnp.exp(s)
    denom = jnp.sum(p, axis=-1, keepdims=True)
    p = p * pl.reciprocal(denom, approx=True)   # EUP slot, frees VALU

    o = jnp.einsum('glm,gmd->gld', p.astype(jnp.bfloat16), v,
                   preferred_element_type=jnp.float32)
    o_ref[...] = o.astype(o_ref.dtype)


def _out_proj_kernel(attn_ref, src_ref, wo_ref, bo_ref, x_ref, stats_ref):
    """Output projection + residual; emits per-tile (sum, sumsq) for BatchNorm #1."""
    a = attn_ref[...].astype(jnp.bfloat16)
    proj = (jnp.dot(a, wo_ref[...].astype(jnp.bfloat16),
                    preferred_element_type=jnp.float32)
            + bo_ref[...].astype(jnp.float32))
    x = src_ref[...].astype(jnp.float32) + proj            # dropout(p=0) == identity
    x_ref[...] = x.astype(x_ref.dtype)

    s = jnp.sum(x, axis=0, keepdims=True)                  # (1, D)
    sq = jnp.sum(x * x, axis=0, keepdims=True)             # (1, D)
    stats_ref[...] = jnp.concatenate([s, sq], axis=0)[None]  # (1, 2, D)


def _ffn_kernel(inv_n, eps, x_ref, p1_ref, ga_ref, ba_ref,
                w1_ref, b1_ref, w2_ref, b2_ref, y_ref, stats_ref):
    """BN1 normalize (global stats from partials) + FFN + residual; emit BN2 partials."""
    x = x_ref[...].astype(jnp.float32)                     # (tm, D)
    tot = jnp.sum(p1_ref[...], axis=0)                     # (2, D)
    mean = tot[0:1, :] * inv_n
    var = tot[1:2, :] * inv_n - mean * mean                # single-pass biased variance
    inv = jax.lax.rsqrt(var + eps)
    xn = (x - mean) * inv * ga_ref[...] + ba_ref[...]

    h = (jnp.dot(xn.astype(jnp.bfloat16), w1_ref[...].astype(jnp.bfloat16),
                 preferred_element_type=jnp.float32) + b1_ref[...])
    h = _gelu_exact(h)
    ff = (jnp.dot(h.astype(jnp.bfloat16), w2_ref[...].astype(jnp.bfloat16),
                  preferred_element_type=jnp.float32) + b2_ref[...])
    y = xn + ff
    y_ref[...] = y.astype(y_ref.dtype)

    s = jnp.sum(y, axis=0, keepdims=True)
    sq = jnp.sum(y * y, axis=0, keepdims=True)
    stats_ref[...] = jnp.concatenate([s, sq], axis=0)[None]


def _bn_kernel(inv_n, eps, y_ref, p2_ref, g_ref, b_ref, out_ref):
    """Final BatchNorm normalization using globally reduced partial stats."""
    y = y_ref[...].astype(jnp.float32)
    tot = jnp.sum(p2_ref[...], axis=0)
    mean = tot[0:1, :] * inv_n
    var = tot[1:2, :] * inv_n - mean * mean
    inv = jax.lax.rsqrt(var + eps)
    out_ref[...] = ((y - mean) * inv * g_ref[...] + b_ref[...]).astype(out_ref.dtype)


# --------------------------------------------------------------------------------------
# wrapper
# --------------------------------------------------------------------------------------
def encoder_layer(src, params, n_heads, eps=1e-5):
    B, L, D = src.shape
    H = n_heads
    dk = D // H
    M = B * L
    G = B * H
    scale = 1.0 / math.sqrt(dk)

    tm = _pick_row_tile(M)
    nm = M // tm
    gt = _pick_group_tile(G, L)
    ng = G // gt

    par = pltpu.CompilerParams(dimension_semantics=("parallel",))
    row_spec = pl.BlockSpec((tm, D), lambda i: (i, 0))
    stat_spec = pl.BlockSpec((1, 2, D), lambda i: (i, 0, 0))

    src2d = src.reshape(M, D)

    # ---- 1) fused Q/K/V projections over flattened rows (big-M, lane-dense matmuls) ----
    proj_in = (src2d, params['wq'], params['bq'], params['wk'], params['bk'],
               params['wv'], params['bv'])
    q2d, k2d, v2d = pl.pallas_call(
        functools.partial(_qkv_proj_kernel, scale),
        grid=(nm,),
        in_specs=[row_spec] + [_full_spec(a.shape) for a in proj_in[1:]],
        out_specs=[row_spec] * 3,
        out_shape=[jax.ShapeDtypeStruct((M, D), jnp.bfloat16)] * 3,
        compiler_params=par,
    )(*proj_in)

    # head-major layout plumbing done once by XLA outside the kernels (cheap, one-off)
    def to_heads(t):
        return t.reshape(B, L, H, dk).transpose(0, 2, 1, 3).reshape(G, L, dk)

    qh, kh, vh = to_heads(q2d), to_heads(k2d), to_heads(v2d)

    # ---- 2) batched SDPA over (batch*head) groups ----
    group_spec = pl.BlockSpec((gt, L, dk), lambda i: (i, 0, 0))
    oh = pl.pallas_call(
        _attn_kernel,
        grid=(ng,),
        in_specs=[group_spec] * 3,
        out_specs=group_spec,
        out_shape=jax.ShapeDtypeStruct((G, L, dk), jnp.bfloat16),
        compiler_params=par,
    )(qh, kh, vh)

    attn2d = oh.reshape(B, H, L, dk).transpose(0, 2, 1, 3).reshape(M, D)

    # ---- 3) output projection + residual + BN1 partial stats ----
    x_pre, stats1 = pl.pallas_call(
        _out_proj_kernel,
        grid=(nm,),
        in_specs=[row_spec, row_spec,
                  _full_spec(params['wo'].shape), _full_spec(params['bo'].shape)],
        out_specs=[row_spec, stat_spec],
        out_shape=[jax.ShapeDtypeStruct((M, D), jnp.float32),
                   jax.ShapeDtypeStruct((nm, 2, D), jnp.float32)],
        compiler_params=par,
    )(attn2d, src2d, params['wo'], params['bo'])

    # ---- 4) BN1 normalize + FFN + residual + BN2 partial stats ----
    ffn_in = (x_pre, stats1, params['gamma_attn'], params['beta_attn'],
              params['w1'], params['b1'], params['w2'], params['b2'])
    y_pre, stats2 = pl.pallas_call(
        functools.partial(_ffn_kernel, 1.0 / M, eps),
        grid=(nm,),
        in_specs=[row_spec] + [_full_spec(a.shape) for a in ffn_in[1:]],
        out_specs=[row_spec, stat_spec],
        out_shape=[jax.ShapeDtypeStruct((M, D), jnp.float32),
                   jax.ShapeDtypeStruct((nm, 2, D), jnp.float32)],
        compiler_params=par,
    )(*ffn_in)

    # ---- 5) BN2 normalize ----
    bn_in = (y_pre, stats2, params['gamma_ffn'], params['beta_ffn'])
    out2d = pl.pallas_call(
        functools.partial(_bn_kernel, 1.0 / M, eps),
        grid=(nm,),
        in_specs=[row_spec] + [_full_spec(a.shape) for a in bn_in[1:]],
        out_specs=row_spec,
        out_shape=jax.ShapeDtypeStruct((M, D), jnp.float32),
        compiler_params=par,
    )(*bn_in)

    return out2d.reshape(B, L, D)


# --------------------------------------------------------------------------------------
# pure-JAX reference (f32) for self-check
# --------------------------------------------------------------------------------------
def encoder_layer_ref(src, params, n_heads, eps=1e-5):
    B, L, D = src.shape
    dk = D // n_heads
    x2d = src.reshape(B * L, D)
    q = (x2d @ params['wq'] + params['bq']) / math.sqrt(dk)
    k = x2d @ params['wk'] + params['bk']
    v = x2d @ params['wv'] + params['bv']

    def heads(t):
        return t.reshape(B, L, n_heads, dk).transpose(0, 2, 1, 3)

    qh, kh, vh = heads(q), heads(k), heads(v)
    s = jnp.einsum('bhld,bhmd->bhlm', qh, kh)
    p = jax.nn.softmax(s, axis=-1)
    o = jnp.einsum('bhlm,bhmd->bhld', p, vh)
    o2d = o.transpose(0, 2, 1, 3).reshape(B * L, D)
    attn = o2d @ params['wo'] + params['bo']
    x = x2d + attn

    def bn(t, g, b):
        mean = jnp.mean(t, axis=0, keepdims=True)
        var = jnp.mean((t - mean) ** 2, axis=0, keepdims=True)
        return (t - mean) * jax.lax.rsqrt(var + eps) * g + b

    x = bn(x, params['gamma_attn'], params['beta_attn'])
    h = _gelu_exact(x @ params['w1'] + params['b1'])
    y = x + (h @ params['w2'] + params['b2'])
    y = bn(y, params['gamma_ffn'], params['beta_ffn'])
    return y.reshape(B, L, D)


def init_params(key, d_model, d_ff):
    ks = jax.random.split(key, 6)
    s = 0.02

    def lin(k, fan_in, fan_out):
        return s * jax.random.normal(k, (fan_in, fan_out), jnp.float32)

    return {
        'wq': lin(ks[0], d_model, d_model), 'bq': jnp.zeros((1, d_model), jnp.float32),
        'wk': lin(ks[1], d_model, d_model), 'bk': jnp.zeros((1, d_model), jnp.float32),
        'wv': lin(ks[2], d_model, d_model), 'bv': jnp.zeros((1, d_model), jnp.float32),
        'wo': lin(ks[3], d_model, d_model), 'bo': 0.01 * jnp.ones((1, d_model), jnp.float32),
        'w1': lin(ks[4], d_model, d_ff),    'b1': 0.01 * jnp.ones((1, d_ff), jnp.float32),
        'w2': lin(ks[5], d_ff, d_model),    'b2': 0.01 * jnp.ones((1, d_model), jnp.float32),
        # BatchNorm1d affine params (weight=1, bias=0 at init, like PyTorch)
        'gamma_attn': jnp.ones((1, d_model), jnp.float32),
        'beta_attn': jnp.zeros((1, d_model), jnp.float32),
        'gamma_ffn': jnp.ones((1, d_model), jnp.float32),
        'beta_ffn': jnp.zeros((1, d_model), jnp.float32),
    }


if __name__ == "__main__":
    B, L, D, H, D_FF = 2, 8, 32, 4, 64   # bs x q_len x d_model, n_heads, d_ff

    key = jax.random.PRNGKey(0)
    k_src, k_par = jax.random.split(key)
    src = jax.random.normal(k_src, (B, L, D), jnp.float32)
    params = init_params(k_par, D, D_FF)

    out = jax.block_until_ready(encoder_layer(src, params, H))
    ref = jax.block_until_ready(encoder_layer_ref(src, params, H))

    assert out.shape == (B, L, D)
    assert bool(jnp.all(jnp.isfinite(out)))
    err = float(jnp.max(jnp.abs(out - ref)))
    assert err < 1e-1, f"max abs error vs reference: {err}"
    print("KERNEL_OK")
</pallas_src>

<mosaic_0001>
module attributes {stable_mosaic.version = 11 : i64} {
  func.func @_qkv_proj_kernel(%arg0: i32, %arg1: memref<16x32xf32, #tpu.memory_space<vmem>>, %arg2: memref<32x32xf32, #tpu.memory_space<vmem>>, %arg3: memref<1x32xf32, #tpu.memory_space<vmem>>, %arg4: memref<32x32xf32, #tpu.memory_space<vmem>>, %arg5: memref<1x32xf32, #tpu.memory_space<vmem>>, %arg6: memref<32x32xf32, #tpu.memory_space<vmem>>, %arg7: memref<1x32xf32, #tpu.memory_space<vmem>>, %arg8: memref<16x32xbf16, #tpu.memory_space<vmem>>, %arg9: memref<16x32xbf16, #tpu.memory_space<vmem>>, %arg10: memref<16x32xbf16, #tpu.memory_space<vmem>>) attributes {dimension_semantics = [#tpu.dimension_semantics<parallel>], iteration_bounds = array<i64: 1>, scalar_prefetch = 0 : i64, scratch_operands = 0 : i64, tpu.core_type = #tpu.core_type<tc>, window_params = [{transform_indices = @transform_0, window_bounds = array<i64: 16, 32>}, {pipeline_mode = #tpu.pipeline_mode<synchronous>, transform_indices = @transform_1, window_bounds = array<i64: 32, 32>}, {pipeline_mode = #tpu.pipeline_mode<synchronous>, transform_indices = @transform_2, window_bounds = array<i64: 1, 32>}, {pipeline_mode = #tpu.pipeline_mode<synchronous>, transform_indices = @transform_3, window_bounds = array<i64: 32, 32>}, {pipeline_mode = #tpu.pipeline_mode<synchronous>, transform_indices = @transform_4, window_bounds = array<i64: 1, 32>}, {pipeline_mode = #tpu.pipeline_mode<synchronous>, transform_indices = @transform_5, window_bounds = array<i64: 32, 32>}, {pipeline_mode = #tpu.pipeline_mode<synchronous>, transform_indices = @transform_6, window_bounds = array<i64: 1, 32>}, {transform_indices = @transform_7, window_bounds = array<i64: 16, 32>}, {transform_indices = @transform_8, window_bounds = array<i64: 16, 32>}, {transform_indices = @transform_9, window_bounds = array<i64: 16, 32>}]} {
    %c0 = arith.constant 0 : index
    %c0_0 = arith.constant 0 : index
    %0 = vector.load %arg1[%c0, %c0_0] : memref<16x32xf32, #tpu.memory_space<vmem>>, vector<16x32xf32>
    %1 = arith.truncf %0 : vector<16x32xf32> to vector<16x32xbf16>
    %c0_1 = arith.constant 0 : index
    %c0_2 = arith.constant 0 : index
    %2 = vector.load %arg2[%c0_1, %c0_2] : memref<32x32xf32, #tpu.memory_space<vmem>>, vector<32x32xf32>
    %3 = arith.truncf %2 : vector<32x32xf32> to vector<32x32xbf16>
    %cst = arith.constant dense<0.000000e+00> : vector<16x32xf32>
    %4 = tpu.matmul %1, %3, %cst {dimension_numbers = #tpu.dot_dimension_numbers<[1], [0], [0], [1], [0, 0, 1, 1], [], []>} : vector<16x32xbf16>, vector<32x32xbf16>, vector<16x32xf32> -> vector<16x32xf32>
    %c0_3 = arith.constant 0 : index
    %c0_4 = arith.constant 0 : index
    %5 = vector.load %arg3[%c0_3, %c0_4] : memref<1x32xf32, #tpu.memory_space<vmem>>, vector<1x32xf32>
    %6 = vector.broadcast %5 : vector<1x32xf32> to vector<16x32xf32>
    %7 = arith.addf %4, %6 : vector<16x32xf32>
    %cst_5 = arith.constant 0.353553385 : f32
    %8 = vector.broadcast %cst_5 : f32 to vector<16x32xf32>
    %9 = arith.mulf %7, %8 : vector<16x32xf32>
    %10 = arith.truncf %9 : vector<16x32xf32> to vector<16x32xbf16>
    %c0_6 = arith.constant 0 : index
    %c0_7 = arith.constant 0 : index
    %11 = vector.load %arg8[%c0_6, %c0_7] : memref<16x32xbf16, #tpu.memory_space<vmem>>, vector<16x32xbf16>
    tpu.vector_store %arg8[%c0_6, %c0_7], %10 {strides = array<i32>} : memref<16x32xbf16, #tpu.memory_space<vmem>>, vector<16x32xbf16>,
    %c0_8 = arith.constant 0 : index
    %c0_9 = arith.constant 0 : index
    %12 = vector.load %arg4[%c0_8, %c0_9] : memref<32x32xf32, #tpu.memory_space<vmem>>, vector<32x32xf32>
    %13 = arith.truncf %12 : vector<32x32xf32> to vector<32x32xbf16>
    %cst_10 = arith.constant dense<0.000000e+00> : vector<16x32xf32>
    %14 = tpu.matmul %1, %13, %cst_10 {dimension_numbers = #tpu.dot_dimension_numbers<[1], [0], [0], [1], [0, 0, 1, 1], [], []>} : vector<16x32xbf16>, vector<32x32xbf16>, vector<16x32xf32> -> vector<16x32xf32>
    %c0_11 = arith.constant 0 : index
    %c0_12 = arith.constant 0 : index
    %15 = vector.load %arg5[%c0_11, %c0_12] : memref<1x32xf32, #tpu.memory_space<vmem>>, vector<1x32xf32>
    %16 = vector.broadcast %15 : vector<1x32xf32> to vector<16x32xf32>
    %17 = arith.addf %14, %16 : vector<16x32xf32>
    %18 = arith.truncf %17 : vector<16x32xf32> to vector<16x32xbf16>
    %c0_13 = arith.constant 0 : index
    %c0_14 = arith.constant 0 : index
    %19 = vector.load %arg9[%c0_13, %c0_14] : memref<16x32xbf16, #tpu.memory_space<vmem>>, vector<16x32xbf16>
    tpu.vector_store %arg9[%c0_13, %c0_14], %18 {strides = array<i32>} : memref<16x32xbf16, #tpu.memory_space<vmem>>, vector<16x32xbf16>,
    %c0_15 = arith.constant 0 : index
    %c0_16 = arith.constant 0 : index
    %20 = vector.load %arg6[%c0_15, %c0_16] : memref<32x32xf32, #tpu.memory_space<vmem>>, vector<32x32xf32>
    %21 = arith.truncf %20 : vector<32x32xf32> to vector<32x32xbf16>
    %cst_17 = arith.constant dense<0.000000e+00> : vector<16x32xf32>
    %22 = tpu.matmul %1, %21, %cst_17 {dimension_numbers = #tpu.dot_dimension_numbers<[1], [0], [0], [1], [0, 0, 1, 1], [], []>} : vector<16x32xbf16>, vector<32x32xbf16>, vector<16x32xf32> -> vector<16x32xf32>
    %c0_18 = arith.constant 0 : index
    %c0_19 = arith.constant 0 : index
    %23 = vector.load %arg7[%c0_18, %c0_19] : memref<1x32xf32, #tpu.memory_space<vmem>>, vector<1x32xf32>
    %24 = vector.broadcast %23 : vector<1x32xf32> to vector<16x32xf32>
    %25 = arith.addf %22, %24 : vector<16x32xf32>
    %26 = arith.truncf %25 : vector<16x32xf32> to vector<16x32xbf16>
    %c0_20 = arith.constant 0 : index
    %c0_21 = arith.constant 0 : index
    %27 = vector.load %arg10[%c0_20, %c0_21] : memref<16x32xbf16, #tpu.memory_space<vmem>>, vector<16x32xbf16>
    tpu.vector_store %arg10[%c0_20, %c0_21], %26 {strides = array<i32>} : memref<16x32xbf16, #tpu.memory_space<vmem>>, vector<16x32xbf16>,
    return
  }
  func.func @transform_0(%arg0: i32) -> (i32, i32) {
    %c0_i32 = arith.constant 0 : i32
    %c0_i32_0 = arith.constant 0 : i32
    return %arg0, %c0_i32 : i32, i32
  }
  func.func @transform_1(%arg0: i32) -> (i32, i32) {
    %c0_i32 = arith.constant 0 : i32
    %c0_i32_0 = arith.constant 0 : i32
    %c0_i32_1 = arith.constant 0 : i32
    return %c0_i32, %c0_i32_0 : i32, i32
  }
  func.func @transform_2(%arg0: i32) -> (i32, i32) {
    %c0_i32 = arith.constant 0 : i32
    %c0_i32_0 = arith.constant 0 : i32
    %c0_i32_1 = arith.constant 0 : i32
    return %c0_i32, %c0_i32_0 : i32, i32
  }
  func.func @transform_3(%arg0: i32) -> (i32, i32) {
    %c0_i32 = arith.constant 0 : i32
    %c0_i32_0 = arith.constant 0 : i32
    %c0_i32_1 = arith.constant 0 : i32
    return %c0_i32, %c0_i32_0 : i32, i32
  }
  func.func @transform_4(%arg0: i32) -> (i32, i32) {
    %c0_i32 = arith.constant 0 : i32
    %c0_i32_0 = arith.constant 0 : i32
    %c0_i32_1 = arith.constant 0 : i32
    return %c0_i32, %c0_i32_0 : i32, i32
  }
  func.func @transform_5(%arg0: i32) -> (i32, i32) {
    %c0_i32 = arith.constant 0 : i32
    %c0_i32_0 = arith.constant 0 : i32
    %c0_i32_1 = arith.constant 0 : i32
    return %c0_i32, %c0_i32_0 : i32, i32
  }
  func.func @transform_6(%arg0: i32) -> (i32, i32) {
    %c0_i32 = arith.constant 0 : i32
    %c0_i32_0 = arith.constant 0 : i32
    %c0_i32_1 = arith.constant 0 : i32
    return %c0_i32, %c0_i32_0 : i32, i32
  }
  func.func @transform_7(%arg0: i32) -> (i32, i32) {
    %c0_i32 = arith.constant 0 : i32
    %c0_i32_0 = arith.constant 0 : i32
    return %arg0, %c0_i32 : i32, i32
  }
  func.func @transform_8(%arg0: i32) -> (i32, i32) {
    %c0_i32 = arith.constant 0 : i32
    %c0_i32_0 = arith.constant 0 : i32
    return %arg0, %c0_i32 : i32, i32
  }
  func.func @transform_9(%arg0: i32) -> (i32, i32) {
    %c0_i32 = arith.constant 0 : i32
    %c0_i32_0 = arith.constant 0 : i32
    return %arg0, %c0_i32 : i32, i32
  }
}

</mosaic_0001>

<llo_original>
// kernel: tpu_custom_call.1
$region0: #{tpu_custom_call.1}
  #allocation0 [shape = 'u32[]', space=smem, size = 0x4, offset = 0x4, fixed_abs, tag = 'smem constant byte address 0x4 - core index']
  #allocation1 [shape = 'u32[144,128]{1,0:T(1,128)}', space=vmem, size = 0x12000, scoped, tag = 'internal scratch']
  %s0 = inlined_call_operand.hbm [shape: f32[16,32], index: 0, kind: input, shape index: {}]
  %s1 = inlined_call_operand.hbm [shape: f32[32,32], index: 1, kind: input, shape index: {}]
  %s2 = inlined_call_operand.vmem [shape: f32[1,32], index: 2, kind: input, shape index: {}]
  %s3 = inlined_call_operand.hbm [shape: f32[32,32], index: 3, kind: input, shape index: {}]
  %s4 = inlined_call_operand.vmem [shape: f32[1,32], index: 4, kind: input, shape index: {}]
  %s5 = inlined_call_operand.hbm [shape: f32[32,32], index: 5, kind: input, shape index: {}]
  %s6 = inlined_call_operand.vmem [shape: f32[1,32], index: 6, kind: input, shape index: {}]
  %s7 = inlined_call_operand.hbm [shape: bf16[16,32], index: 7, kind: output, shape index: {0}]
  %s8 = inlined_call_operand.hbm [shape: bf16[16,32], index: 8, kind: output, shape index: {1}]
  %s9 = inlined_call_operand.hbm [shape: bf16[16,32], index: 9, kind: output, shape index: {2}]
  %10 = xla_tuple %s7, %s8, %s9
  %s11 = sld [smem:[#allocation0]]
  $region70: #{tpu_custom_call.1} parent=0
    _
  %s13 = ssub.s32 1, %s11
  %s14 = scalar_select 0, %s13, %s11
  $region1: #{tpu_custom_call.1} parent=0
    #allocation2 [shape = 'u8[8192]{0}', space=vmem, size = 0x2000, scoped, tag = 'input window, operand 0, single buffered']
    #allocation3 [shape = 's32[1]{0}', space=sflag, size = 0x4, scoped, tag = 'scoped memory for tpu_custom_call.1']
    #allocation4 [shape = 's32[1]{0}', space=sflag, size = 0x4, scoped, tag = 'scoped memory for tpu_custom_call.1']
    #allocation5 [shape = 'u8[16384]{0}', space=vmem, size = 0x4000, scoped, tag = 'input window, operand 1, single buffered']
    #allocation6 [shape = 's32[1]{0}', space=sflag, size = 0x4, scoped, tag = 'scoped memory for tpu_custom_call.1']
    #allocation7 [shape = 'u8[16384]{0}', space=vmem, size = 0x4000, scoped, tag = 'input window, operand 3, single buffered']
    #allocation8 [shape = 'u8[16384]{0}', space=vmem, size = 0x4000, scoped, tag = 'input window, operand 5, single buffered']
    #allocation9 [shape = 's32[1]{0}', space=sflag, size = 0x4, scoped, tag = 'scoped memory for tpu_custom_call.1']
    #allocation10 [shape = 'u8[4096]{0}', space=vmem, size = 0x1000, scoped, tag = 'output window, operand 0, single buffered']
    #allocation11 [shape = 'u8[4096]{0}', space=vmem, size = 0x1000, scoped, tag = 'output window, operand 1, single buffered']
    #allocation12 [shape = 's32[1]{0}', space=sflag, size = 0x4, scoped, tag = 'scoped memory for tpu_custom_call.1']
    #allocation13 [shape = 'u8[4096]{0}', space=vmem, size = 0x1000, scoped, tag = 'output window, operand 2, single buffered']
    %15 = vsyncpa [#allocation3], 0
    %16 = vsyncpa [#allocation6], 0
    %17 = vsyncpa [#allocation9], 0
    %18 = vsyncpa [#allocation4], 0
    %19 = vsyncpa [#allocation12], 0
    // Predicated region
    $region2: #{tpu_custom_call.1} parent=1 // pred_check
      _
    $region3: #{tpu_custom_call.1} parent=1 // pred_check_branch
      %21 = sbr.rel (0) target = $region5
    $region4: #{tpu_custom_call.1} parent=1 // pred_region
      %s23 = ssub.s32 256, 256
      %24 = vsyncadd [#allocation3], %s23
      %s25 = sshll.u32 [#allocation2], 4
      %s26 = int_to_ptr.vmem [resolvable:$true] %s25
      %31 = dma.hbm_to_vmem [thread:$0]  %s0, 256, %s26, [#allocation3], 128, 128, 8
    $region5: #{tpu_custom_call.1} parent=1 // pred_fallthru
      _
    // Predicated region
    $region6: #{tpu_custom_call.1} parent=1 // pred_check
      _
    $region7: #{tpu_custom_call.1} parent=1 // pred_check_branch
      %33 = sbr.rel (0) target = $region9
    $region8: #{tpu_custom_call.1} parent=1 // pred_region
      %s35 = ssub.s32 512, 512
      %36 = vsyncadd [#allocation6], %s35
      %s37 = sshll.u32 [#allocation5], 4
      %s38 = int_to_ptr.vmem [resolvable:$true] %s37
      %43 = dma.hbm_to_vmem [thread:$0]  %s1, 512, %s38, [#allocation6], 128, 128, 8
    $region9: #{tpu_custom_call.1} parent=1 // pred_fallthru
      _
    // Predicated region
    $region10: #{tpu_custom_call.1} parent=1 // pred_check
      _
    $region11: #{tpu_custom_call.1} parent=1 // pred_check_branch
      %45 = sbr.rel (0) target = $region13
    $region12: #{tpu_custom_call.1} parent=1 // pred_region
      _
    $region13: #{tpu_custom_call.1} parent=1 // pred_fallthru
      _
    // Predicated region
    $region14: #{tpu_custom_call.1} parent=1 // pred_check
      _
    $region15: #{tpu_custom_call.1} parent=1 // pred_check_branch
      %47 = sbr.rel (0) target = $region17
    $region16: #{tpu_custom_call.1} parent=1 // pred_region
      %s49 = ssub.s32 512, 512
      %50 = vsyncadd [#allocation6], %s49
      %s51 = sshll.u32 [#allocation7], 4
      %s52 = int_to_ptr.vmem [resolvable:$true] %s51
      %57 = dma.hbm_to_vmem [thread:$0]  %s3, 512, %s52, [#allocation6], 128, 128, 8
    $region17: #{tpu_custom_call.1} parent=1 // pred_fallthru
      _
    // Predicated region
    $region18: #{tpu_custom_call.1} parent=1 // pred_check
      _
    $region19: #{tpu_custom_call.1} parent=1 // pred_check_branch
      %59 = sbr.rel (0) target = $region21
    $region20: #{tpu_custom_call.1} parent=1 // pred_region
      _
    $region21: #{tpu_custom_call.1} parent=1 // pred_fallthru
      _
    // Predicated region
    $region22: #{tpu_custom_call.1} parent=1 // pred_check
      _
    $region23: #{tpu_custom_call.1} parent=1 // pred_check_branch
      %61 = sbr.rel (0) target = $region25
    $region24: #{tpu_custom_call.1} parent=1 // pred_region
      %s63 = ssub.s32 512, 512
      %64 = vsyncadd [#allocation9], %s63
      %s65 = sshll.u32 [#allocation8], 4
      %s66 = int_to_ptr.vmem [resolvable:$true] %s65
      %71 = dma.hbm_to_vmem [thread:$0]  %s5, 512, %s66, [#allocation9], 128, 128, 8
    $region25: #{tpu_custom_call.1} parent=1 // pred_fallthru
      _
    // Predicated region
    $region26: #{tpu_custom_call.1} parent=1 // pred_check
      _
    $region27: #{tpu_custom_call.1} parent=1 // pred_check_branch
      %73 = sbr.rel (0) target = $region29
    $region28: #{tpu_custom_call.1} parent=1 // pred_region
      _
    $region29: #{tpu_custom_call.1} parent=1 // pred_fallthru
      _
    // Predicated region
    $region30: #{tpu_custom_call.1} parent=1 // pred_check
      _
    $region31: #{tpu_custom_call.1} parent=1 // pred_check_branch
      %75 = sbr.rel (0) target = $region33
    $region32: #{tpu_custom_call.1} parent=1 // pred_region
      %76 = dma.done [#allocation3], 256
    $region33: #{tpu_custom_call.1} parent=1 // pred_fallthru
      _
    // Predicated region
    $region34: #{tpu_custom_call.1} parent=1 // pred_check
      _
    $region35: #{tpu_custom_call.1} parent=1 // pred_check_branch
      %78 = sbr.rel (0) target = $region37
    $region36: #{tpu_custom_call.1} parent=1 // pred_region
      %79 = dma.done [#allocation6], 512
    $region37: #{tpu_custom_call.1} parent=1 // pred_fallthru
      _
    // Predicated region
    $region38: #{tpu_custom_call.1} parent=1 // pred_check
      _
    $region39: #{tpu_custom_call.1} parent=1 // pred_check_branch
      %81 = sbr.rel (0) target = $region41
    $region40: #{tpu_custom_call.1} parent=1 // pred_region
      %82 = dma.done [#allocation6], 512
    $region41: #{tpu_custom_call.1} parent=1 // pred_fallthru
      _
    // Predicated region
    $region42: #{tpu_custom_call.1} parent=1 // pred_check
      _
    $region43: #{tpu_custom_call.1} parent=1 // pred_check_branch
      %84 = sbr.rel (0) target = $region45
    $region44: #{tpu_custom_call.1} parent=1 // pred_region
      %85 = dma.done [#allocation9], 512
    $region45: #{tpu_custom_call.1} parent=1 // pred_fallthru
      _
    %v87 = vld [vmem:[#allocation2] sm:$0xff]
    %v88 = vld [vmem:[#allocation2 + $0x8] sm:$0xff]
    %v89 = vpack.c.bf16 %v88, %v87
    %v90 = vld [vmem:[#allocation5] sm:$0xff]
    %v91 = vld [vmem:[#allocation5 + $0x8] sm:$0xff]
    %v92 = vld [vmem:[#allocation5 + $0x10] sm:$0xff]
    %v93 = vld [vmem:[#allocation5 + $0x18] sm:$0xff]
    %v94 = vpack.c.bf16 %v91, %v90
    %v95 = vpack.c.bf16 %v93, %v92
    %v96 = vld [vmem:[%s2] sm:$0x1]
    %v98 = vlaneseq
    %v99 = vshrl.u32 %v98, 7
    %v100 = vsub.s32 0, %v99
    %v101 = vrot.slane %v96, %v100
    %vm103 = vcmask 261120
    %v105 = vsel %vm103, %v89, 0
    %107 = vmatprep.subr.bf16.mxu0 0
    %108 = vmatpush1.bf16.msra.mxu0 %v94
    %109 = vmatprep.subr.bf16.mxu0 0
    %110 = vmatpush1.bf16.msra.mxu0 %v95
    %111 = vmatprep.subr.bf16.mxu0 0
    %112 = vmatpush1.bf16.msra.mxu0 0
    %113 = vmatprep.subr.bf16.mxu0 0
    %114 = vmatpush1.bf16.msra.mxu0 0
    %115 = vmatprep.subr.bf16.mxu0 0
    %116 = vmatpush1.bf16.msra.mxu0 0
    %117 = vmatprep.subr.bf16.mxu0 0
    %118 = vmatpush1.bf16.msra.mxu0 0
    %119 = vmatprep.subr.bf16.mxu0 0
    %120 = vmatpush1.bf16.msra.mxu0 0
    %121 = vmatprep.subr.bf16.mxu0 0
    %122 = vmatpush1.bf16.msra.mxu0 0
    %123 = vmatprep.subr.bf16.mxu0 0
    %124 = vmatpush1.bf16.msra.mxu0 0
    %125 = vmatprep.subr.bf16.mxu0 0
    %126 = vmatpush1.bf16.msra.mxu0 0
    %127 = vmatprep.subr.bf16.mxu0 0
    %128 = vmatpush1.bf16.msra.mxu0 0
    %129 = vmatprep.subr.bf16.mxu0 0
    %130 = vmatpush1.bf16.msra.mxu0 0
    %131 = vmatprep.subr.bf16.mxu0 0
    %132 = vmatpush1.bf16.msra.mxu0 0
    %133 = vmatprep.subr.bf16.mxu0 0
    %134 = vmatpush1.bf16.msra.mxu0 0
    %135 = vmatprep.subr.bf16.mxu0 0
    %136 = vmatpush1.bf16.msra.mxu0 0
    %137 = vmatprep.subr.bf16.mxu0 0
    %138 = vmatpush1.bf16.msra.mxu0 0
    %139 = vmatprep.mubr.bf16.mxu0 0
    %140 = vmatmul.mubr.bf16.gmra.mrb[0].mxu0 %v105
    %v141 = vpop.f32.mrb[0].mxu0
    %v142 = vadd.f32 %v101, %v141
    %v143 = vpop.f32.mrb[0].mxu0
    %v144 = vpop.f32.mrb[0].mxu0
    %v145 = vadd.f32 %v101, %v144
    %v146 = vpop.f32.mrb[0].mxu0
    %147 = vdwg.mxu0
    %v148 = vmul.f32 %v142, 0.35355338
    %v149 = vmul.f32 %v145, 0.35355338
    %v150 = vpack.c.bf16 %v149, %v148
    %v152 = vunpack.c.l.b16 %v150
    %v153 = vunpack.c.h.b16 %v150
    %v154 = vpack.c.b16 %v152, %v152
    %v155 = vpack.c.b16 %v153, %v153
    %vm158 = vcmask 257024
    %159 = vst.msk [vmem:[#allocation10] sm:$0xf] %vm158, %v154
    %160 = vst.msk [vmem:[#allocation10 + $0x4] sm:$0xf] %vm158, %v155
    %v161 = vld [vmem:[#allocation7] sm:$0xff]
    %v162 = vld [vmem:[#allocation7 + $0x8] sm:$0xff]
    %v163 = vld [vmem:[#allocation7 + $0x10] sm:$0xff]
    %v164 = vld [vmem:[#allocation7 + $0x18] sm:$0xff]
    %v165 = vpack.c.bf16 %v162, %v161
    %v166 = vpack.c.bf16 %v164, %v163
    %v167 = vld [vmem:[%s4] sm:$0x1]
    %v169 = vlaneseq
    %v170 = vshrl.u32 %v169, 7
    %v171 = vsub.s32 0, %v170
    %v172 = vrot.slane %v167, %v171
    %174 = vmatprep.subr.bf16.mxu0 0
    %175 = vmatpush1.bf16.msra.mxu0 %v165
    %176 = vmatprep.subr.bf16.mxu0 0
    %177 = vmatpush1.bf16.msra.mxu0 %v166
    %178 = vmatprep.subr.bf16.mxu0 0
    %179 = vmatpush1.bf16.msra.mxu0 0
    %180 = vmatprep.subr.bf16.mxu0 0
    %181 = vmatpush1.bf16.msra.mxu0 0
    %182 = vmatprep.subr.bf16.mxu0 0
    %183 = vmatpush1.bf16.msra.mxu0 0
    %184 = vmatprep.subr.bf16.mxu0 0
    %185 = vmatpush1.bf16.msra.mxu0 0
    %186 = vmatprep.subr.bf16.mxu0 0
    %187 = vmatpush1.bf16.msra.mxu0 0
    %188 = vmatprep.subr.bf16.mxu0 0
    %189 = vmatpush1.bf16.msra.mxu0 0
    %190 = vmatprep.subr.bf16.mxu0 0
    %191 = vmatpush1.bf16.msra.mxu0 0
    %192 = vmatprep.subr.bf16.mxu0 0
    %193 = vmatpush1.bf16.msra.mxu0 0
    %194 = vmatprep.subr.bf16.mxu0 0
    %195 = vmatpush1.bf16.msra.mxu0 0
    %196 = vmatprep.subr.bf16.mxu0 0
    %197 = vmatpush1.bf16.msra.mxu0 0
    %198 = vmatprep.subr.bf16.mxu0 0
    %199 = vmatpush1.bf16.msra.mxu0 0
    %200 = vmatprep.subr.bf16.mxu0 0
    %201 = vmatpush1.bf16.msra.mxu0 0
    %202 = vmatprep.subr.bf16.mxu0 0
    %203 = vmatpush1.bf16.msra.mxu0 0
    %204 = vmatprep.subr.bf16.mxu0 0
    %205 = vmatpush1.bf16.msra.mxu0 0
    %206 = vmatprep.mubr.bf16.mxu0 0
    %207 = vmatmul.mubr.bf16.gmra.mrb[0].mxu0 %v105
    %v208 = vpop.f32.mrb[0].mxu0
    %v209 = vadd.f32 %v172, %v208
    %v210 = vpop.f32.mrb[0].mxu0
    %v211 = vpop.f32.mrb[0].mxu0
    %v212 = vadd.f32 %v172, %v211
    %v213 = vpop.f32.mrb[0].mxu0
    %214 = vdwg.mxu0
    %v215 = vpack.c.bf16 %v212, %v209
    %v217 = vunpack.c.l.b16 %v215
    %v218 = vunpack.c.h.b16 %v215
    %v219 = vpack.c.b16 %v217, %v217
    %v220 = vpack.c.b16 %v218, %v218
    %223 = vst.msk [vmem:[#allocation11] sm:$0xf] %vm158, %v219
    %224 = vst.msk [vmem:[#allocation11 + $0x4] sm:$0xf] %vm158, %v220
    %v225 = vld [vmem:[#allocation8] sm:$0xff]
    %v226 = vld [vmem:[#allocation8 + $0x8] sm:$0xff]
    %v227 = vld [vmem:[#allocation8 + $0x10] sm:$0xff]
    %v228 = vld [vmem:[#allocation8 + $0x18] sm:$0xff]
    %v229 = vpack.c.bf16 %v226, %v225
    %v230 = vpack.c.bf16 %v228, %v227
    %v231 = vld [vmem:[%s6] sm:$0x1]
    %v233 = vlaneseq
    %v234 = vshrl.u32 %v233, 7
    %v235 = vsub.s32 0, %v234
    %v236 = vrot.slane %v231, %v235
    %238 = vmatprep.subr.bf16.mxu0 0
    %239 = vmatpush1.bf16.msra.mxu0 %v229
    %240 = vmatprep.subr.bf16.mxu0 0
    %241 = vmatpush1.bf16.msra.mxu0 %v230
    %242 = vmatprep.subr.bf16.mxu0 0
    %243 = vmatpush1.bf16.msra.mxu0 0
    %244 = vmatprep.subr.bf16.mxu0 0
    %245 = vmatpush1.bf16.msra.mxu0 0
    %246 = vmatprep.subr.bf16.mxu0 0
    %247 = vmatpush1.bf16.msra.mxu0 0
    %248 = vmatprep.subr.bf16.mxu0 0
    %249 = vmatpush1.bf16.msra.mxu0 0
    %250 = vmatprep.subr.bf16.mxu0 0
    %251 = vmatpush1.bf16.msra.mxu0 0
    %252 = vmatprep.subr.bf16.mxu0 0
    %253 = vmatpush1.bf16.msra.mxu0 0
    %254 = vmatprep.subr.bf16.mxu0 0
    %255 = vmatpush1.bf16.msra.mxu0 0
    %256 = vmatprep.subr.bf16.mxu0 0
    %257 = vmatpush1.bf16.msra.mxu0 0
    %258 = vmatprep.subr.bf16.mxu0 0
    %259 = vmatpush1.bf16.msra.mxu0 0
    %260 = vmatprep.subr.bf16.mxu0 0
    %261 = vmatpush1.bf16.msra.mxu0 0
    %262 = vmatprep.subr.bf16.mxu0 0
    %263 = vmatpush1.bf16.msra.mxu0 0
    %264 = vmatprep.subr.bf16.mxu0 0
    %265 = vmatpush1.bf16.msra.mxu0 0
    %266 = vmatprep.subr.bf16.mxu0 0
    %267 = vmatpush1.bf16.msra.mxu0 0
    %268 = vmatprep.subr.bf16.mxu0 0
    %269 = vmatpush1.bf16.msra.mxu0 0
    %270 = vmatprep.mubr.bf16.mxu0 0
    %271 = vmatmul.mubr.bf16.gmra.mrb[0].mxu0 %v105
    %v272 = vpop.f32.mrb[0].mxu0
    %v273 = vadd.f32 %v236, %v272
    %v274 = vpop.f32.mrb[0].mxu0
    %v275 = vpop.f32.mrb[0].mxu0
    %v276 = vadd.f32 %v236, %v275
    %v277 = vpop.f32.mrb[0].mxu0
    %278 = vdwg.mxu0
    %v279 = vpack.c.bf16 %v276, %v273
    %v281 = vunpack.c.l.b16 %v279
    %v282 = vunpack.c.h.b16 %v279
    %v283 = vpack.c.b16 %v281, %v281
    %v284 = vpack.c.b16 %v282, %v282
    %287 = vst.msk [vmem:[#allocation13] sm:$0xf] %vm158, %v283
    %288 = vst.msk [vmem:[#allocation13 + $0x4] sm:$0xf] %vm158, %v284
    // Predicated region
    $region46: #{tpu_custom_call.1} parent=1 // pred_check
      _
    $region47: #{tpu_custom_call.1} parent=1 // pred_check_branch
      %290 = sbr.rel (0) target = $region49
    $region48: #{tpu_custom_call.1} parent=1 // pred_region
      %s292 = ssub.s32 128, 128
      %293 = vsyncadd [#allocation4], %s292
      %s294 = sshll.u32 [#allocation10], 4
      %s295 = int_to_ptr.vmem [resolvable:$true] %s294
      %300 = dma.vmem_to_hbm [thread:$0]  %s295, 128, %s7, [#allocation4], 64, 64, 4
    $region49: #{tpu_custom_call.1} parent=1 // pred_fallthru
      _
    // Predicated region
    $region50: #{tpu_custom_call.1} parent=1 // pred_check
      _
    $region51: #{tpu_custom_call.1} parent=1 // pred_check_branch
      %302 = sbr.rel (0) target = $region53
    $region52: #{tpu_custom_call.1} parent=1 // pred_region
      %s304 = ssub.s32 128, 128
      %305 = vsyncadd [#allocation12], %s304
      %s306 = sshll.u32 [#allocation11], 4
      %s307 = int_to_ptr.vmem [resolvable:$true] %s306
      %312 = dma.vmem_to_hbm [thread:$0]  %s307, 128, %s8, [#allocation12], 64, 64, 4
    $region53: #{tpu_custom_call.1} parent=1 // pred_fallthru
      _
    // Predicated region
    $region54: #{tpu_custom_call.1} parent=1 // pred_check
      _
    $region55: #{tpu_custom_call.1} parent=1 // pred_check_branch
      %314 = sbr.rel (0) target = $region57
    $region56: #{tpu_custom_call.1} parent=1 // pred_region
      %s316 = ssub.s32 128, 128
      %317 = vsyncadd [#allocation12], %s316
      %s318 = sshll.u32 [#allocation13], 4
      %s319 = int_to_ptr.vmem [resolvable:$true] %s318
      %324 = dma.vmem_to_hbm [thread:$0]  %s319, 128, %s9, [#allocation12], 64, 64, 4
    $region57: #{tpu_custom_call.1} parent=1 // pred_fallthru
      _
    // Predicated region
    $region58: #{tpu_custom_call.1} parent=1 // pred_check
      _
    $region59: #{tpu_custom_call.1} parent=1 // pred_check_branch
      %326 = sbr.rel (0) target = $region61
    $region60: #{tpu_custom_call.1} parent=1 // pred_region
      %327 = dma.done [#allocation4], 128
    $region61: #{tpu_custom_call.1} parent=1 // pred_fallthru
      _
    // Predicated region
    $region62: #{tpu_custom_call.1} parent=1 // pred_check
      _
    $region63: #{tpu_custom_call.1} parent=1 // pred_check_branch
      %329 = sbr.rel (0) target = $region65
    $region64: #{tpu_custom_call.1} parent=1 // pred_region
      %330 = dma.done [#allocation12], 128
    $region65: #{tpu_custom_call.1} parent=1 // pred_fallthru
      _
    // Predicated region
    $region66: #{tpu_custom_call.1} parent=1 // pred_check
      _
    $region67: #{tpu_custom_call.1} parent=1 // pred_check_branch
      %332 = sbr.rel (0) target = $region69
    $region68: #{tpu_custom_call.1} parent=1 // pred_region
      %333 = dma.done [#allocation12], 128
    $region69: #{tpu_custom_call.1} parent=1 // pred_fallthru
      _
    %334 = vsyncpa [#allocation3], 1
    %335 = vsyncpa [#allocation6], 1
    %336 = vsyncpa [#allocation9], 1
    %337 = vsyncpa [#allocation4], 1
    %338 = vsyncpa [#allocation12], 1

</llo_original>
